<compile_context>
chip_gen: v7x
topology: tpu7x:2x2x1
jax: 0.10.0
libtpu: 0.0.40
codegen_flags: <defaults>
</compile_context>

<pallas_src>
import functools

import jax
import jax.numpy as jnp
from jax import lax
from jax.experimental import pallas as pl
from jax.experimental.pallas import tpu as pltpu


# Output rows gathered per grid step (sublane-aligned, 256*128*4B = 128 KiB f32 tile).
TILE_ROWS = 256
# DMA semaphores used round-robin for the per-row gather copies (static indices).
DMA_GROUP = 8


def _embedding_gather_kernel(ids_ref, emb_hbm, out_ref, gather_buf, sems, *, tile_rows):
    """Gather `tile_rows` embedding rows via async DMA from the HBM table.

    ids_ref    : SMEM int32[(n_pad,)]           scalar-prefetched (clamped, padded) ids
    emb_hbm    : HBM  f32[(num_nodes, h_dim)]   table left in place (memory_space=pl.ANY)
    out_ref    : VMEM f32[(tile_rows, h_dim)]   current output tile (pipelined writeback)
    gather_buf : VMEM f32[(tile_rows, h_dim)]   DMA landing buffer
    sems       : DMA semaphores [(DMA_GROUP,)]
    """
    tile = pl.program_id(0)
    base = tile * tile_rows
    n_groups = tile_rows // DMA_GROUP

    # --- Issue all row-gather DMAs (DMA engine does the gather; VLIW core stays idle).
    def issue_group(g, carry):
        for r in range(DMA_GROUP):                 # static unroll -> static sem index
            j = g * DMA_GROUP + r
            nid = ids_ref[base + j]                # dynamic scalar read from SMEM
            pltpu.make_async_copy(
                emb_hbm.at[pl.ds(nid, 1), :],      # one table row in HBM
                gather_buf.at[pl.ds(j, 1), :],     # one row of the VMEM landing buffer
                sems.at[r],
            ).start()
        return carry

    lax.fori_loop(0, n_groups, issue_group, 0)

    # --- Wait for all of them (same byte count / semaphore per wait as issued).
    def wait_group(g, carry):
        for r in range(DMA_GROUP):
            j = g * DMA_GROUP + r
            pltpu.make_async_copy(
                emb_hbm.at[pl.ds(0, 1), :],        # src irrelevant for wait; shape matters
                gather_buf.at[pl.ds(j, 1), :],
                sems.at[r],
            ).wait()
        return carry

    lax.fori_loop(0, n_groups, wait_group, 0)

    # --- Single full-tile, unmasked store into the pipelined output block.
    out_ref[...] = gather_buf[...]


def embedding_layer_forward(node_id, emb_table, *, tile_rows=TILE_ROWS):
    """Pallas equivalent of EmbeddingLayer.forward.

    node_id:   int array of shape (N,) or (N, 1)   (the `g.ndata['id']`)
    emb_table: f32 array of shape (num_nodes, h_dim)
    returns:   f32 array of shape (N, h_dim)        (the `g.ndata['h']`)
    """
    num_nodes, h_dim = emb_table.shape
    assert tile_rows % DMA_GROUP == 0

    # torch .squeeze() on the (N, 1) id column -> flat (N,) index vector.
    ids = node_id.reshape(-1).astype(jnp.int32)
    # Bounds safety: VMEM/HBM refs have no runtime OOB check, so clamp in the wrapper.
    ids = jnp.clip(ids, 0, num_nodes - 1)

    n_ids = ids.shape[0]
    n_tiles = pl.cdiv(n_ids, tile_rows)
    n_pad = n_tiles * tile_rows
    ids_padded = jnp.pad(ids, (0, n_pad - n_ids))   # pad with row 0 (a valid index)

    kernel = functools.partial(_embedding_gather_kernel, tile_rows=tile_rows)

    gathered = pl.pallas_call(
        kernel,
        out_shape=jax.ShapeDtypeStruct((n_pad, h_dim), emb_table.dtype),
        grid_spec=pltpu.PrefetchScalarGridSpec(
            num_scalar_prefetch=1,                    # node ids -> SMEM before the grid
            grid=(n_tiles,),
            in_specs=[
                pl.BlockSpec(memory_space=pl.ANY),    # table stays in HBM; gathered via DMA
            ],
            out_specs=pl.BlockSpec((tile_rows, h_dim), lambda i, ids: (i, 0)),
            scratch_shapes=[
                pltpu.VMEM((tile_rows, h_dim), emb_table.dtype),
                pltpu.SemaphoreType.DMA((DMA_GROUP,)),
            ],
        ),
        compiler_params=pltpu.CompilerParams(
            dimension_semantics=("parallel",),        # independent tiles -> megacore on v7x
        ),
    )(ids_padded, emb_table)

    return gathered[:n_ids]


if __name__ == "__main__":
    k_emb, k_ids, k_emb2, k_ids2 = jax.random.split(jax.random.PRNGKey(0), 4)

    # --- Case 1: shapes matching the module's usage (ids arrive as (N, 1)). ---------
    num_nodes, h_dim, n_ids = 64, 128, 16
    emb_table = jax.random.normal(k_emb, (num_nodes, h_dim), dtype=jnp.float32)
    node_id = jax.random.randint(k_ids, (n_ids, 1), 0, num_nodes, dtype=jnp.int32)

    h = jax.block_until_ready(embedding_layer_forward(node_id, emb_table))
    ref = jnp.take(emb_table, node_id.reshape(-1), axis=0)
    assert h.shape == (n_ids, h_dim)
    assert jnp.array_equal(h, ref), "Pallas gather mismatch vs reference (case 1)"

    # --- Case 2: non-tile-multiple batch and non-8-multiple vocab (tail path). ------
    num_nodes2, n_ids2 = 500, 300
    emb_table2 = jax.random.normal(k_emb2, (num_nodes2, h_dim), dtype=jnp.float32)
    node_id2 = jax.random.randint(k_ids2, (n_ids2,), 0, num_nodes2, dtype=jnp.int32)

    h2 = jax.block_until_ready(embedding_layer_forward(node_id2, emb_table2))
    ref2 = jnp.take(emb_table2, node_id2, axis=0)
    assert h2.shape == (n_ids2, h_dim)
    assert jnp.array_equal(h2, ref2), "Pallas gather mismatch vs reference (case 2)"

    # TODO(synk): the DGL graph side-effect (g.ndata['h'] = ...) has no Pallas analog;
    # the gathered embeddings are returned as an array instead.
    print("KERNEL_OK")
</pallas_src>

<mosaic_0001>
module attributes {stable_mosaic.version = 11 : i64} {
  func.func @_embedding_gather_kernel(%arg0: i32, %arg1: memref<256xi32, #tpu.memory_space<smem>>, %arg2: memref<64x128xf32, #tpu.memory_space<any>>, %arg3: memref<256x128xf32, #tpu.memory_space<vmem>>, %arg4: memref<256x128xf32, #tpu.memory_space<vmem>>, %arg5: memref<8x!tpu.dma_semaphore, #tpu.memory_space<semaphore_mem>>) attributes {dimension_semantics = [#tpu.dimension_semantics<parallel>], iteration_bounds = array<i64: 1>, scalar_prefetch = 1 : i64, scratch_operands = 2 : i64, tpu.core_type = #tpu.core_type<tc>, window_params = [{}, {transform_indices = @transform_1, window_bounds = array<i64: 256, 128>}]} {
    %c256_i32 = arith.constant 256 : i32
    %0 = arith.muli %arg0, %c256_i32 : i32
    %c0_i32 = arith.constant 0 : i32
    %c32_i32 = arith.constant 32 : i32
    %1 = arith.addi %c0_i32, %c32_i32 : i32
    %c1_i32 = arith.constant 1 : i32
    scf.for %arg6 = %c0_i32 to %1 step %c1_i32  : i32 {
      %c8_i32 = arith.constant 8 : i32
      %5 = arith.muli %arg6, %c8_i32 : i32
      %c0_i32_8 = arith.constant 0 : i32
      %6 = arith.addi %5, %c0_i32_8 : i32
      %7 = arith.addi %0, %6 : i32
      %8 = arith.index_cast %7 : i32 to index
      %9 = memref.load %arg1[%8] : memref<256xi32, #tpu.memory_space<smem>>
      %c0_i32_9 = arith.constant 0 : i32
      %c0_i32_10 = arith.constant 0 : i32
      %10 = tpu.memref_slice %arg2[%9, %c0_i32_10] : memref<64x128xf32, #tpu.memory_space<any>> -> memref<1x128xf32, #tpu.memory_space<any>>
      %c0_i32_11 = arith.constant 0 : i32
      %11 = tpu.memref_slice %arg4[%6, %c0_i32_11] : memref<256x128xf32, #tpu.memory_space<vmem>> -> memref<1x128xf32, #tpu.memory_space<vmem>>
      %12 = tpu.memref_slice %arg5[%c0_i32_9] : memref<8x!tpu.dma_semaphore, #tpu.memory_space<semaphore_mem>> -> memref<1x!tpu.dma_semaphore, #tpu.memory_space<semaphore_mem>>
      %13 = tpu.memref_squeeze %12 : memref<1x!tpu.dma_semaphore, #tpu.memory_space<semaphore_mem>> -> memref<!tpu.dma_semaphore, #tpu.memory_space<semaphore_mem>>
      tpu.enqueue_dma source(%10 : memref<1x128xf32, #tpu.memory_space<any>>) target(%11 : memref<1x128xf32, #tpu.memory_space<vmem>>) target_semaphore(%13 : memref<!tpu.dma_semaphore, #tpu.memory_space<semaphore_mem>>)
      %c8_i32_12 = arith.constant 8 : i32
      %14 = arith.muli %arg6, %c8_i32_12 : i32
      %c1_i32_13 = arith.constant 1 : i32
      %15 = arith.addi %14, %c1_i32_13 : i32
      %16 = arith.addi %0, %15 : i32
      %17 = arith.index_cast %16 : i32 to index
      %18 = memref.load %arg1[%17] : memref<256xi32, #tpu.memory_space<smem>>
      %c1_i32_14 = arith.constant 1 : i32
      %c0_i32_15 = arith.constant 0 : i32
      %19 = tpu.memref_slice %arg2[%18, %c0_i32_15] : memref<64x128xf32, #tpu.memory_space<any>> -> memref<1x128xf32, #tpu.memory_space<any>>
      %c0_i32_16 = arith.constant 0 : i32
      %20 = tpu.memref_slice %arg4[%15, %c0_i32_16] : memref<256x128xf32, #tpu.memory_space<vmem>> -> memref<1x128xf32, #tpu.memory_space<vmem>>
      %21 = tpu.memref_slice %arg5[%c1_i32_14] : memref<8x!tpu.dma_semaphore, #tpu.memory_space<semaphore_mem>> -> memref<1x!tpu.dma_semaphore, #tpu.memory_space<semaphore_mem>>
      %22 = tpu.memref_squeeze %21 : memref<1x!tpu.dma_semaphore, #tpu.memory_space<semaphore_mem>> -> memref<!tpu.dma_semaphore, #tpu.memory_space<semaphore_mem>>
      tpu.enqueue_dma source(%19 : memref<1x128xf32, #tpu.memory_space<any>>) target(%20 : memref<1x128xf32, #tpu.memory_space<vmem>>) target_semaphore(%22 : memref<!tpu.dma_semaphore, #tpu.memory_space<semaphore_mem>>)
      %c8_i32_17 = arith.constant 8 : i32
      %23 = arith.muli %arg6, %c8_i32_17 : i32
      %c2_i32 = arith.constant 2 : i32
      %24 = arith.addi %23, %c2_i32 : i32
      %25 = arith.addi %0, %24 : i32
      %26 = arith.index_cast %25 : i32 to index
      %27 = memref.load %arg1[%26] : memref<256xi32, #tpu.memory_space<smem>>
      %c2_i32_18 = arith.constant 2 : i32
      %c0_i32_19 = arith.constant 0 : i32
      %28 = tpu.memref_slice %arg2[%27, %c0_i32_19] : memref<64x128xf32, #tpu.memory_space<any>> -> memref<1x128xf32, #tpu.memory_space<any>>
      %c0_i32_20 = arith.constant 0 : i32
      %29 = tpu.memref_slice %arg4[%24, %c0_i32_20] : memref<256x128xf32, #tpu.memory_space<vmem>> -> memref<1x128xf32, #tpu.memory_space<vmem>>
      %30 = tpu.memref_slice %arg5[%c2_i32_18] : memref<8x!tpu.dma_semaphore, #tpu.memory_space<semaphore_mem>> -> memref<1x!tpu.dma_semaphore, #tpu.memory_space<semaphore_mem>>
      %31 = tpu.memref_squeeze %30 : memref<1x!tpu.dma_semaphore, #tpu.memory_space<semaphore_mem>> -> memref<!tpu.dma_semaphore, #tpu.memory_space<semaphore_mem>>
      tpu.enqueue_dma source(%28 : memref<1x128xf32, #tpu.memory_space<any>>) target(%29 : memref<1x128xf32, #tpu.memory_space<vmem>>) target_semaphore(%31 : memref<!tpu.dma_semaphore, #tpu.memory_space<semaphore_mem>>)
      %c8_i32_21 = arith.constant 8 : i32
      %32 = arith.muli %arg6, %c8_i32_21 : i32
      %c3_i32 = arith.constant 3 : i32
      %33 = arith.addi %32, %c3_i32 : i32
      %34 = arith.addi %0, %33 : i32
      %35 = arith.index_cast %34 : i32 to index
      %36 = memref.load %arg1[%35] : memref<256xi32, #tpu.memory_space<smem>>
      %c3_i32_22 = arith.constant 3 : i32
      %c0_i32_23 = arith.constant 0 : i32
      %37 = tpu.memref_slice %arg2[%36, %c0_i32_23] : memref<64x128xf32, #tpu.memory_space<any>> -> memref<1x128xf32, #tpu.memory_space<any>>
      %c0_i32_24 = arith.constant 0 : i32
      %38 = tpu.memref_slice %arg4[%33, %c0_i32_24] : memref<256x128xf32, #tpu.memory_space<vmem>> -> memref<1x128xf32, #tpu.memory_space<vmem>>
      %39 = tpu.memref_slice %arg5[%c3_i32_22] : memref<8x!tpu.dma_semaphore, #tpu.memory_space<semaphore_mem>> -> memref<1x!tpu.dma_semaphore, #tpu.memory_space<semaphore_mem>>
      %40 = tpu.memref_squeeze %39 : memref<1x!tpu.dma_semaphore, #tpu.memory_space<semaphore_mem>> -> memref<!tpu.dma_semaphore, #tpu.memory_space<semaphore_mem>>
      tpu.enqueue_dma source(%37 : memref<1x128xf32, #tpu.memory_space<any>>) target(%38 : memref<1x128xf32, #tpu.memory_space<vmem>>) target_semaphore(%40 : memref<!tpu.dma_semaphore, #tpu.memory_space<semaphore_mem>>)
      %c8_i32_25 = arith.constant 8 : i32
      %41 = arith.muli %arg6, %c8_i32_25 : i32
      %c4_i32 = arith.constant 4 : i32
      %42 = arith.addi %41, %c4_i32 : i32
      %43 = arith.addi %0, %42 : i32
      %44 = arith.index_cast %43 : i32 to index
      %45 = memref.load %arg1[%44] : memref<256xi32, #tpu.memory_space<smem>>
      %c4_i32_26 = arith.constant 4 : i32
      %c0_i32_27 = arith.constant 0 : i32
      %46 = tpu.memref_slice %arg2[%45, %c0_i32_27] : memref<64x128xf32, #tpu.memory_space<any>> -> memref<1x128xf32, #tpu.memory_space<any>>
      %c0_i32_28 = arith.constant 0 : i32
      %47 = tpu.memref_slice %arg4[%42, %c0_i32_28] : memref<256x128xf32, #tpu.memory_space<vmem>> -> memref<1x128xf32, #tpu.memory_space<vmem>>
      %48 = tpu.memref_slice %arg5[%c4_i32_26] : memref<8x!tpu.dma_semaphore, #tpu.memory_space<semaphore_mem>> -> memref<1x!tpu.dma_semaphore, #tpu.memory_space<semaphore_mem>>
      %49 = tpu.memref_squeeze %48 : memref<1x!tpu.dma_semaphore, #tpu.memory_space<semaphore_mem>> -> memref<!tpu.dma_semaphore, #tpu.memory_space<semaphore_mem>>
      tpu.enqueue_dma source(%46 : memref<1x128xf32, #tpu.memory_space<any>>) target(%47 : memref<1x128xf32, #tpu.memory_space<vmem>>) target_semaphore(%49 : memref<!tpu.dma_semaphore, #tpu.memory_space<semaphore_mem>>)
      %c8_i32_29 = arith.constant 8 : i32
      %50 = arith.muli %arg6, %c8_i32_29 : i32
      %c5_i32 = arith.constant 5 : i32
      %51 = arith.addi %50, %c5_i32 : i32
      %52 = arith.addi %0, %51 : i32
      %53 = arith.index_cast %52 : i32 to index
      %54 = memref.load %arg1[%53] : memref<256xi32, #tpu.memory_space<smem>>
      %c5_i32_30 = arith.constant 5 : i32
      %c0_i32_31 = arith.constant 0 : i32
      %55 = tpu.memref_slice %arg2[%54, %c0_i32_31] : memref<64x128xf32, #tpu.memory_space<any>> -> memref<1x128xf32, #tpu.memory_space<any>>
      %c0_i32_32 = arith.constant 0 : i32
      %56 = tpu.memref_slice %arg4[%51, %c0_i32_32] : memref<256x128xf32, #tpu.memory_space<vmem>> -> memref<1x128xf32, #tpu.memory_space<vmem>>
      %57 = tpu.memref_slice %arg5[%c5_i32_30] : memref<8x!tpu.dma_semaphore, #tpu.memory_space<semaphore_mem>> -> memref<1x!tpu.dma_semaphore, #tpu.memory_space<semaphore_mem>>
      %58 = tpu.memref_squeeze %57 : memref<1x!tpu.dma_semaphore, #tpu.memory_space<semaphore_mem>> -> memref<!tpu.dma_semaphore, #tpu.memory_space<semaphore_mem>>
      tpu.enqueue_dma source(%55 : memref<1x128xf32, #tpu.memory_space<any>>) target(%56 : memref<1x128xf32, #tpu.memory_space<vmem>>) target_semaphore(%58 : memref<!tpu.dma_semaphore, #tpu.memory_space<semaphore_mem>>)
      %c8_i32_33 = arith.constant 8 : i32
      %59 = arith.muli %arg6, %c8_i32_33 : i32
      %c6_i32 = arith.constant 6 : i32
      %60 = arith.addi %59, %c6_i32 : i32
      %61 = arith.addi %0, %60 : i32
      %62 = arith.index_cast %61 : i32 to index
      %63 = memref.load %arg1[%62] : memref<256xi32, #tpu.memory_space<smem>>
      %c6_i32_34 = arith.constant 6 : i32
      %c0_i32_35 = arith.constant 0 : i32
      %64 = tpu.memref_slice %arg2[%63, %c0_i32_35] : memref<64x128xf32, #tpu.memory_space<any>> -> memref<1x128xf32, #tpu.memory_space<any>>
      %c0_i32_36 = arith.constant 0 : i32
      %65 = tpu.memref_slice %arg4[%60, %c0_i32_36] : memref<256x128xf32, #tpu.memory_space<vmem>> -> memref<1x128xf32, #tpu.memory_space<vmem>>
      %66 = tpu.memref_slice %arg5[%c6_i32_34] : memref<8x!tpu.dma_semaphore, #tpu.memory_space<semaphore_mem>> -> memref<1x!tpu.dma_semaphore, #tpu.memory_space<semaphore_mem>>
      %67 = tpu.memref_squeeze %66 : memref<1x!tpu.dma_semaphore, #tpu.memory_space<semaphore_mem>> -> memref<!tpu.dma_semaphore, #tpu.memory_space<semaphore_mem>>
      tpu.enqueue_dma source(%64 : memref<1x128xf32, #tpu.memory_space<any>>) target(%65 : memref<1x128xf32, #tpu.memory_space<vmem>>) target_semaphore(%67 : memref<!tpu.dma_semaphore, #tpu.memory_space<semaphore_mem>>)
      %c8_i32_37 = arith.constant 8 : i32
      %68 = arith.muli %arg6, %c8_i32_37 : i32
      %c7_i32 = arith.constant 7 : i32
      %69 = arith.addi %68, %c7_i32 : i32
      %70 = arith.addi %0, %69 : i32
      %71 = arith.index_cast %70 : i32 to index
      %72 = memref.load %arg1[%71] : memref<256xi32, #tpu.memory_space<smem>>
      %c7_i32_38 = arith.constant 7 : i32
      %c0_i32_39 = arith.constant 0 : i32
      %73 = tpu.memref_slice %arg2[%72, %c0_i32_39] : memref<64x128xf32, #tpu.memory_space<any>> -> memref<1x128xf32, #tpu.memory_space<any>>
      %c0_i32_40 = arith.constant 0 : i32
      %74 = tpu.memref_slice %arg4[%69, %c0_i32_40] : memref<256x128xf32, #tpu.memory_space<vmem>> -> memref<1x128xf32, #tpu.memory_space<vmem>>
      %75 = tpu.memref_slice %arg5[%c7_i32_38] : memref<8x!tpu.dma_semaphore, #tpu.memory_space<semaphore_mem>> -> memref<1x!tpu.dma_semaphore, #tpu.memory_space<semaphore_mem>>
      %76 = tpu.memref_squeeze %75 : memref<1x!tpu.dma_semaphore, #tpu.memory_space<semaphore_mem>> -> memref<!tpu.dma_semaphore, #tpu.memory_space<semaphore_mem>>
      tpu.enqueue_dma source(%73 : memref<1x128xf32, #tpu.memory_space<any>>) target(%74 : memref<1x128xf32, #tpu.memory_space<vmem>>) target_semaphore(%76 : memref<!tpu.dma_semaphore, #tpu.memory_space<semaphore_mem>>)
    }
    %c32_i32_0 = arith.constant 32 : i32
    %c0_i32_1 = arith.constant 0 : i32
    %c32_i32_2 = arith.constant 32 : i32
    %2 = arith.addi %c0_i32_1, %c32_i32_2 : i32
    %c1_i32_3 = arith.constant 1 : i32
    scf.for %arg6 = %c0_i32_1 to %2 step %c1_i32_3  : i32 {
      %c8_i32 = arith.constant 8 : i32
      %5 = arith.muli %arg6, %c8_i32 : i32
      %c0_i32_8 = arith.constant 0 : i32
      %6 = arith.addi %5, %c0_i32_8 : i32
      %c0_i32_9 = arith.constant 0 : i32
      %c0_i32_10 = arith.constant 0 : i32
      %c0_i32_11 = arith.constant 0 : i32
      %7 = tpu.memref_slice %arg2[%c0_i32_10, %c0_i32_11] : memref<64x128xf32, #tpu.memory_space<any>> -> memref<1x128xf32, #tpu.memory_space<any>>
      %c0_i32_12 = arith.constant 0 : i32
      %8 = tpu.memref_slice %arg4[%6, %c0_i32_12] : memref<256x128xf32, #tpu.memory_space<vmem>> -> memref<1x128xf32, #tpu.memory_space<vmem>>
      %9 = tpu.memref_slice %arg5[%c0_i32_9] : memref<8x!tpu.dma_semaphore, #tpu.memory_space<semaphore_mem>> -> memref<1x!tpu.dma_semaphore, #tpu.memory_space<semaphore_mem>>
      %10 = tpu.memref_squeeze %9 : memref<1x!tpu.dma_semaphore, #tpu.memory_space<semaphore_mem>> -> memref<!tpu.dma_semaphore, #tpu.memory_space<semaphore_mem>>
      tpu.wait_dma2 semaphore(%10 : memref<!tpu.dma_semaphore, #tpu.memory_space<semaphore_mem>>) src(%7 : memref<1x128xf32, #tpu.memory_space<any>>) dst(%8 : memref<1x128xf32, #tpu.memory_space<vmem>>)
      %c8_i32_13 = arith.constant 8 : i32
      %11 = arith.muli %arg6, %c8_i32_13 : i32
      %c1_i32_14 = arith.constant 1 : i32
      %12 = arith.addi %11, %c1_i32_14 : i32
      %c1_i32_15 = arith.constant 1 : i32
      %c0_i32_16 = arith.constant 0 : i32
      %c0_i32_17 = arith.constant 0 : i32
      %13 = tpu.memref_slice %arg2[%c0_i32_16, %c0_i32_17] : memref<64x128xf32, #tpu.memory_space<any>> -> memref<1x128xf32, #tpu.memory_space<any>>
      %c0_i32_18 = arith.constant 0 : i32
      %14 = tpu.memref_slice %arg4[%12, %c0_i32_18] : memref<256x128xf32, #tpu.memory_space<vmem>> -> memref<1x128xf32, #tpu.memory_space<vmem>>
      %15 = tpu.memref_slice %arg5[%c1_i32_15] : memref<8x!tpu.dma_semaphore, #tpu.memory_space<semaphore_mem>> -> memref<1x!tpu.dma_semaphore, #tpu.memory_space<semaphore_mem>>
      %16 = tpu.memref_squeeze %15 : memref<1x!tpu.dma_semaphore, #tpu.memory_space<semaphore_mem>> -> memref<!tpu.dma_semaphore, #tpu.memory_space<semaphore_mem>>
      tpu.wait_dma2 semaphore(%16 : memref<!tpu.dma_semaphore, #tpu.memory_space<semaphore_mem>>) src(%13 : memref<1x128xf32, #tpu.memory_space<any>>) dst(%14 : memref<1x128xf32, #tpu.memory_space<vmem>>)
      %c8_i32_19 = arith.constant 8 : i32
      %17 = arith.muli %arg6, %c8_i32_19 : i32
      %c2_i32 = arith.constant 2 : i32
      %18 = arith.addi %17, %c2_i32 : i32
      %c2_i32_20 = arith.constant 2 : i32
      %c0_i32_21 = arith.constant 0 : i32
      %c0_i32_22 = arith.constant 0 : i32
      %19 = tpu.memref_slice %arg2[%c0_i32_21, %c0_i32_22] : memref<64x128xf32, #tpu.memory_space<any>> -> memref<1x128xf32, #tpu.memory_space<any>>
      %c0_i32_23 = arith.constant 0 : i32
      %20 = tpu.memref_slice %arg4[%18, %c0_i32_23] : memref<256x128xf32, #tpu.memory_space<vmem>> -> memref<1x128xf32, #tpu.memory_space<vmem>>
      %21 = tpu.memref_slice %arg5[%c2_i32_20] : memref<8x!tpu.dma_semaphore, #tpu.memory_space<semaphore_mem>> -> memref<1x!tpu.dma_semaphore, #tpu.memory_space<semaphore_mem>>
      %22 = tpu.memref_squeeze %21 : memref<1x!tpu.dma_semaphore, #tpu.memory_space<semaphore_mem>> -> memref<!tpu.dma_semaphore, #tpu.memory_space<semaphore_mem>>
      tpu.wait_dma2 semaphore(%22 : memref<!tpu.dma_semaphore, #tpu.memory_space<semaphore_mem>>) src(%19 : memref<1x128xf32, #tpu.memory_space<any>>) dst(%20 : memref<1x128xf32, #tpu.memory_space<vmem>>)
      %c8_i32_24 = arith.constant 8 : i32
      %23 = arith.muli %arg6, %c8_i32_24 : i32
      %c3_i32 = arith.constant 3 : i32
      %24 = arith.addi %23, %c3_i32 : i32
      %c3_i32_25 = arith.constant 3 : i32
      %c0_i32_26 = arith.constant 0 : i32
      %c0_i32_27 = arith.constant 0 : i32
      %25 = tpu.memref_slice %arg2[%c0_i32_26, %c0_i32_27] : memref<64x128xf32, #tpu.memory_space<any>> -> memref<1x128xf32, #tpu.memory_space<any>>
      %c0_i32_28 = arith.constant 0 : i32
      %26 = tpu.memref_slice %arg4[%24, %c0_i32_28] : memref<256x128xf32, #tpu.memory_space<vmem>> -> memref<1x128xf32, #tpu.memory_space<vmem>>
      %27 = tpu.memref_slice %arg5[%c3_i32_25] : memref<8x!tpu.dma_semaphore, #tpu.memory_space<semaphore_mem>> -> memref<1x!tpu.dma_semaphore, #tpu.memory_space<semaphore_mem>>
      %28 = tpu.memref_squeeze %27 : memref<1x!tpu.dma_semaphore, #tpu.memory_space<semaphore_mem>> -> memref<!tpu.dma_semaphore, #tpu.memory_space<semaphore_mem>>
      tpu.wait_dma2 semaphore(%28 : memref<!tpu.dma_semaphore, #tpu.memory_space<semaphore_mem>>) src(%25 : memref<1x128xf32, #tpu.memory_space<any>>) dst(%26 : memref<1x128xf32, #tpu.memory_space<vmem>>)
      %c8_i32_29 = arith.constant 8 : i32
      %29 = arith.muli %arg6, %c8_i32_29 : i32
      %c4_i32 = arith.constant 4 : i32
      %30 = arith.addi %29, %c4_i32 : i32
      %c4_i32_30 = arith.constant 4 : i32
      %c0_i32_31 = arith.constant 0 : i32
      %c0_i32_32 = arith.constant 0 : i32
      %31 = tpu.memref_slice %arg2[%c0_i32_31, %c0_i32_32] : memref<64x128xf32, #tpu.memory_space<any>> -> memref<1x128xf32, #tpu.memory_space<any>>
      %c0_i32_33 = arith.constant 0 : i32
      %32 = tpu.memref_slice %arg4[%30, %c0_i32_33] : memref<256x128xf32, #tpu.memory_space<vmem>> -> memref<1x128xf32, #tpu.memory_space<vmem>>
      %33 = tpu.memref_slice %arg5[%c4_i32_30] : memref<8x!tpu.dma_semaphore, #tpu.memory_space<semaphore_mem>> -> memref<1x!tpu.dma_semaphore, #tpu.memory_space<semaphore_mem>>
      %34 = tpu.memref_squeeze %33 : memref<1x!tpu.dma_semaphore, #tpu.memory_space<semaphore_mem>> -> memref<!tpu.dma_semaphore, #tpu.memory_space<semaphore_mem>>
      tpu.wait_dma2 semaphore(%34 : memref<!tpu.dma_semaphore, #tpu.memory_space<semaphore_mem>>) src(%31 : memref<1x128xf32, #tpu.memory_space<any>>) dst(%32 : memref<1x128xf32, #tpu.memory_space<vmem>>)
      %c8_i32_34 = arith.constant 8 : i32
      %35 = arith.muli %arg6, %c8_i32_34 : i32
      %c5_i32 = arith.constant 5 : i32
      %36 = arith.addi %35, %c5_i32 : i32
      %c5_i32_35 = arith.constant 5 : i32
      %c0_i32_36 = arith.constant 0 : i32
      %c0_i32_37 = arith.constant 0 : i32
      %37 = tpu.memref_slice %arg2[%c0_i32_36, %c0_i32_37] : memref<64x128xf32, #tpu.memory_space<any>> -> memref<1x128xf32, #tpu.memory_space<any>>
      %c0_i32_38 = arith.constant 0 : i32
      %38 = tpu.memref_slice %arg4[%36, %c0_i32_38] : memref<256x128xf32, #tpu.memory_space<vmem>> -> memref<1x128xf32, #tpu.memory_space<vmem>>
      %39 = tpu.memref_slice %arg5[%c5_i32_35] : memref<8x!tpu.dma_semaphore, #tpu.memory_space<semaphore_mem>> -> memref<1x!tpu.dma_semaphore, #tpu.memory_space<semaphore_mem>>
      %40 = tpu.memref_squeeze %39 : memref<1x!tpu.dma_semaphore, #tpu.memory_space<semaphore_mem>> -> memref<!tpu.dma_semaphore, #tpu.memory_space<semaphore_mem>>
      tpu.wait_dma2 semaphore(%40 : memref<!tpu.dma_semaphore, #tpu.memory_space<semaphore_mem>>) src(%37 : memref<1x128xf32, #tpu.memory_space<any>>) dst(%38 : memref<1x128xf32, #tpu.memory_space<vmem>>)
      %c8_i32_39 = arith.constant 8 : i32
      %41 = arith.muli %arg6, %c8_i32_39 : i32
      %c6_i32 = arith.constant 6 : i32
      %42 = arith.addi %41, %c6_i32 : i32
      %c6_i32_40 = arith.constant 6 : i32
      %c0_i32_41 = arith.constant 0 : i32
      %c0_i32_42 = arith.constant 0 : i32
      %43 = tpu.memref_slice %arg2[%c0_i32_41, %c0_i32_42] : memref<64x128xf32, #tpu.memory_space<any>> -> memref<1x128xf32, #tpu.memory_space<any>>
      %c0_i32_43 = arith.constant 0 : i32
      %44 = tpu.memref_slice %arg4[%42, %c0_i32_43] : memref<256x128xf32, #tpu.memory_space<vmem>> -> memref<1x128xf32, #tpu.memory_space<vmem>>
      %45 = tpu.memref_slice %arg5[%c6_i32_40] : memref<8x!tpu.dma_semaphore, #tpu.memory_space<semaphore_mem>> -> memref<1x!tpu.dma_semaphore, #tpu.memory_space<semaphore_mem>>
      %46 = tpu.memref_squeeze %45 : memref<1x!tpu.dma_semaphore, #tpu.memory_space<semaphore_mem>> -> memref<!tpu.dma_semaphore, #tpu.memory_space<semaphore_mem>>
      tpu.wait_dma2 semaphore(%46 : memref<!tpu.dma_semaphore, #tpu.memory_space<semaphore_mem>>) src(%43 : memref<1x128xf32, #tpu.memory_space<any>>) dst(%44 : memref<1x128xf32, #tpu.memory_space<vmem>>)
      %c8_i32_44 = arith.constant 8 : i32
      %47 = arith.muli %arg6, %c8_i32_44 : i32
      %c7_i32 = arith.constant 7 : i32
      %48 = arith.addi %47, %c7_i32 : i32
      %c7_i32_45 = arith.constant 7 : i32
      %c0_i32_46 = arith.constant 0 : i32
      %c0_i32_47 = arith.constant 0 : i32
      %49 = tpu.memref_slice %arg2[%c0_i32_46, %c0_i32_47] : memref<64x128xf32, #tpu.memory_space<any>> -> memref<1x128xf32, #tpu.memory_space<any>>
      %c0_i32_48 = arith.constant 0 : i32
      %50 = tpu.memref_slice %arg4[%48, %c0_i32_48] : memref<256x128xf32, #tpu.memory_space<vmem>> -> memref<1x128xf32, #tpu.memory_space<vmem>>
      %51 = tpu.memref_slice %arg5[%c7_i32_45] : memref<8x!tpu.dma_semaphore, #tpu.memory_space<semaphore_mem>> -> memref<1x!tpu.dma_semaphore, #tpu.memory_space<semaphore_mem>>
      %52 = tpu.memref_squeeze %51 : memref<1x!tpu.dma_semaphore, #tpu.memory_space<semaphore_mem>> -> memref<!tpu.dma_semaphore, #tpu.memory_space<semaphore_mem>>
      tpu.wait_dma2 semaphore(%52 : memref<!tpu.dma_semaphore, #tpu.memory_space<semaphore_mem>>) src(%49 : memref<1x128xf32, #tpu.memory_space<any>>) dst(%50 : memref<1x128xf32, #tpu.memory_space<vmem>>)
    }
    %c32_i32_4 = arith.constant 32 : i32
    %c0 = arith.constant 0 : index
    %c0_5 = arith.constant 0 : index
    %3 = vector.load %arg4[%c0, %c0_5] : memref<256x128xf32, #tpu.memory_space<vmem>>, vector<256x128xf32>
    %c0_6 = arith.constant 0 : index
    %c0_7 = arith.constant 0 : index
    %4 = vector.load %arg3[%c0_6, %c0_7] : memref<256x128xf32, #tpu.memory_space<vmem>>, vector<256x128xf32>
    tpu.vector_store %arg3[%c0_6, %c0_7], %3 {strides = array<i32>} : memref<256x128xf32, #tpu.memory_space<vmem>>, vector<256x128xf32>,
    return
  }
  func.func @transform_1(%arg0: i32, %arg1: memref<256xi32, #tpu.memory_space<smem>>) -> (i32, i32) {
    %c0_i32 = arith.constant 0 : i32
    %c0_i32_0 = arith.constant 0 : i32
    return %arg0, %c0_i32 : i32, i32
  }
}

</mosaic_0001>

<llo_original>
// kernel: tpu_custom_call.1
$region0: #{tpu_custom_call.1}
  #allocation0 [shape = 'u32[]', space=smem, size = 0x4, offset = 0x4, fixed_abs, tag = 'smem constant byte address 0x4 - core index']
  #allocation1 [shape = 'u32[144,128]{1,0:T(1,128)}', space=vmem, size = 0x12000, scoped, tag = 'internal scratch']
  #allocation2 [shape = 'f32[256,128]{1,0:T(8,128)}', space=vmem, size = 0x20000, scoped, tag = 'scratch operand']
  #allocation3 [shape = 's32[8]{0}', space=sflag, size = 0x20, scoped, tag = 'scratch operand']
  #allocation4 [shape = 's32[1]{0}', space=sflag, size = 0x4, scoped, tag = 'scoped memory for tpu_custom_call.1']
  #allocation5 [shape = 'u8[1024]{0}', space=smem, size = 0x400, scoped, tag = 'prefetched SMEM operand 0']
  #allocation8 [shape = 's32[]', space=sflag, size = 0x4, offset = 0, fixed_abs, tag = 'sflag constant byte address 0x0 - dummy sync flag']
  #allocation9 [shape = 's32[]', space=sflag, size = 0x4, offset = 0, fixed_abs, tag = 'sflag constant byte address 0x0 - dummy sync flag']
  #allocation10 [shape = 'u32[]', space=smem, size = 0x4, offset = 0x44, fixed_abs, tag = 'smem constant byte address 0x44 - assertion arg 0']
  #allocation11 [shape = 'u32[]', space=smem, size = 0x4, offset = 0x48, fixed_abs, tag = 'smem constant byte address 0x48 - assertion arg 1']
  #allocation12 [shape = 's32[]', space=sflag, size = 0x4, offset = 0, fixed_abs, tag = 'sflag constant byte address 0x0 - dummy sync flag']
  #allocation13 [shape = 's32[]', space=sflag, size = 0x4, offset = 0, fixed_abs, tag = 'sflag constant byte address 0x0 - dummy sync flag']
  #allocation14 [shape = 's32[]', space=sflag, size = 0x4, offset = 0, fixed_abs, tag = 'sflag constant byte address 0x0 - dummy sync flag']
  #allocation15 [shape = 's32[]', space=sflag, size = 0x4, offset = 0, fixed_abs, tag = 'sflag constant byte address 0x0 - dummy sync flag']
  #allocation16 [shape = 's32[]', space=sflag, size = 0x4, offset = 0, fixed_abs, tag = 'sflag constant byte address 0x0 - dummy sync flag']
  #allocation17 [shape = 's32[]', space=sflag, size = 0x4, offset = 0, fixed_abs, tag = 'sflag constant byte address 0x0 - dummy sync flag']
  #allocation18 [shape = 's32[]', space=sflag, size = 0x4, offset = 0, fixed_abs, tag = 'sflag constant byte address 0x0 - dummy sync flag']
  #allocation19 [shape = 's32[]', space=sflag, size = 0x4, offset = 0, fixed_abs, tag = 'sflag constant byte address 0x0 - dummy sync flag']
  #allocation20 [shape = 's32[]', space=sflag, size = 0x4, offset = 0, fixed_abs, tag = 'sflag constant byte address 0x0 - dummy sync flag']
  #allocation21 [shape = 's32[]', space=sflag, size = 0x4, offset = 0, fixed_abs, tag = 'sflag constant byte address 0x0 - dummy sync flag']
  #allocation22 [shape = 's32[]', space=sflag, size = 0x4, offset = 0, fixed_abs, tag = 'sflag constant byte address 0x0 - dummy sync flag']
  #allocation23 [shape = 's32[]', space=sflag, size = 0x4, offset = 0, fixed_abs, tag = 'sflag constant byte address 0x0 - dummy sync flag']
  #allocation24 [shape = 's32[]', space=sflag, size = 0x4, offset = 0, fixed_abs, tag = 'sflag constant byte address 0x0 - dummy sync flag']
  #allocation25 [shape = 's32[]', space=sflag, size = 0x4, offset = 0, fixed_abs, tag = 'sflag constant byte address 0x0 - dummy sync flag']
  %s0 = inlined_call_operand.hbm [shape: s32[256], index: 0, kind: input, shape index: {}]
  %s1 = inlined_call_operand.hbm [shape: f32[64,128], index: 1, kind: input, shape index: {}]
  %s2 = inlined_call_operand.hbm [shape: f32[256,128], index: 2, kind: output, shape index: {}]
  %s3 = sld [smem:[#allocation0]]
  $region56: #{tpu_custom_call.1} parent=0
    _
  %s5 = ssub.s32 1, %s3
  %s6 = scalar_select 0, %s5, %s3
  %8 = dma.hbm_to_smem %s0, 32, [#allocation5], [#allocation4]
  %9 = dma.done [#allocation4], 32
  %10 = sfence
  $region1: #{tpu_custom_call.1} parent=0
    #allocation6 [shape = 'u8[131072]{0}', space=vmem, size = 0x20000, scoped, tag = 'output window, operand 0, single buffered']
    #allocation7 [shape = 's32[1]{0}', space=sflag, size = 0x4, scoped, tag = 'scoped memory for tpu_custom_call.1']
    %11 = vsyncpa [#allocation7], 0
    %s12 = smul.u32 0, 256
    loop: start=0, step=1, limit=32
    $region2: #{tpu_custom_call.1} parent=1 // loop_pre_header
      _
    $region3: #{tpu_custom_call.1} parent=1 // loop_header
      %s14 = sphi 0, %s18
      %p15 = scmp.ge.s32.totalorder %s14, 32
    $region4: #{tpu_custom_call.1} parent=1 // loop_header_branch
      %17 = sbr.rel (%p15) target = $region8
    $region5: #{tpu_custom_call.1} parent=1 // loop_body
      %s19 = smul.u32 %s14, 8
      %s20 = sadd.s32 %s12, %s19
      %s21 = sld [smem:[#allocation5 + %s20]]
      %s22 = smul.addr %s21, 16
      %s23 = scalar_lea.hbm %s1, %s22
      %s24 = scalar_lea.vmem [#allocation2], %s19
      // Predicated region
      $region9: #{tpu_custom_call.1} parent=5 // pred_check
        _
      $region10: #{tpu_custom_call.1} parent=5 // pred_check_branch
        %26 = sbr.rel target = $region12
      $region11: #{tpu_custom_call.1} parent=5 // pred_region
        %27 = sst [smem:[#allocation10]] [#allocation9]
        %28 = sst [smem:[#allocation11]] [#allocation8]
      $region12: #{tpu_custom_call.1} parent=5 // pred_fallthru
        _
      %30 = shalt.err (0)
      %s32 = sshll.u32 %s24, 4
      %s33 = int_to_ptr.vmem [resolvable:$true] %s32
      %35 = dma.hbm_to_vmem [thread:$0]  %s23, 16, %s33, [#allocation3]
      %s36 = sadd.s32 %s19, 1
      %s37 = sadd.s32 %s12, %s36
      %s38 = sld [smem:[#allocation5 + %s37]]
      %s39 = smul.addr %s38, 16
      %s40 = scalar_lea.hbm %s1, %s39
      %s41 = scalar_lea.vmem [#allocation2], %s36
      %s42 = scalar_lea.sflag [#allocation3], 1
      // Predicated region
      $region13: #{tpu_custom_call.1} parent=5 // pred_check
        _
      $region14: #{tpu_custom_call.1} parent=5 // pred_check_branch
        %44 = sbr.rel target = $region16
      $region15: #{tpu_custom_call.1} parent=5 // pred_region
        %45 = sst [smem:[#allocation10]] [#allocation13]
        %46 = sst [smem:[#allocation11]] [#allocation12]
      $region16: #{tpu_custom_call.1} parent=5 // pred_fallthru
        _
      %48 = shalt.err (0)
      %s50 = sshll.u32 %s41, 4
      %s51 = int_to_ptr.vmem [resolvable:$true] %s50
      %53 = dma.hbm_to_vmem [thread:$0]  %s40, 16, %s51, %s42
      %s54 = sadd.s32 %s19, 2
      %s55 = sadd.s32 %s12, %s54
      %s56 = sld [smem:[#allocation5 + %s55]]
      %s57 = smul.addr %s56, 16
      %s58 = scalar_lea.hbm %s1, %s57
      %s59 = scalar_lea.vmem [#allocation2], %s54
      %s60 = scalar_lea.sflag [#allocation3], 2
      // Predicated region
      $region17: #{tpu_custom_call.1} parent=5 // pred_check
        _
      $region18: #{tpu_custom_call.1} parent=5 // pred_check_branch
        %62 = sbr.rel target = $region20
      $region19: #{tpu_custom_call.1} parent=5 // pred_region
        %63 = sst [smem:[#allocation10]] [#allocation15]
        %64 = sst [smem:[#allocation11]] [#allocation14]
      $region20: #{tpu_custom_call.1} parent=5 // pred_fallthru
        _
      %66 = shalt.err (0)
      %s68 = sshll.u32 %s59, 4
      %s69 = int_to_ptr.vmem [resolvable:$true] %s68
      %71 = dma.hbm_to_vmem [thread:$0]  %s58, 16, %s69, %s60
      %s72 = sadd.s32 %s19, 3
      %s73 = sadd.s32 %s12, %s72
      %s74 = sld [smem:[#allocation5 + %s73]]
      %s75 = smul.addr %s74, 16
      %s76 = scalar_lea.hbm %s1, %s75
      %s77 = scalar_lea.vmem [#allocation2], %s72
      %s78 = scalar_lea.sflag [#allocation3], 3
      // Predicated region
      $region21: #{tpu_custom_call.1} parent=5 // pred_check
        _
      $region22: #{tpu_custom_call.1} parent=5 // pred_check_branch
        %80 = sbr.rel target = $region24
      $region23: #{tpu_custom_call.1} parent=5 // pred_region
        %81 = sst [smem:[#allocation10]] [#allocation17]
        %82 = sst [smem:[#allocation11]] [#allocation16]
      $region24: #{tpu_custom_call.1} parent=5 // pred_fallthru
        _
      %84 = shalt.err (0)
      %s86 = sshll.u32 %s77, 4
      %s87 = int_to_ptr.vmem [resolvable:$true] %s86
      %89 = dma.hbm_to_vmem [thread:$0]  %s76, 16, %s87, %s78
      %s90 = sadd.s32 %s19, 4
      %s91 = sadd.s32 %s12, %s90
      %s92 = sld [smem:[#allocation5 + %s91]]
      %s93 = smul.addr %s92, 16
      %s94 = scalar_lea.hbm %s1, %s93
      %s95 = scalar_lea.vmem [#allocation2], %s90
      %s96 = scalar_lea.sflag [#allocation3], 4
      // Predicated region
      $region25: #{tpu_custom_call.1} parent=5 // pred_check
        _
      $region26: #{tpu_custom_call.1} parent=5 // pred_check_branch
        %98 = sbr.rel target = $region28
      $region27: #{tpu_custom_call.1} parent=5 // pred_region
        %99 = sst [smem:[#allocation10]] [#allocation19]
        %100 = sst [smem:[#allocation11]] [#allocation18]
      $region28: #{tpu_custom_call.1} parent=5 // pred_fallthru
        _
      %102 = shalt.err (0)
      %s104 = sshll.u32 %s95, 4
      %s105 = int_to_ptr.vmem [resolvable:$true] %s104
      %107 = dma.hbm_to_vmem [thread:$0]  %s94, 16, %s105, %s96
      %s108 = sadd.s32 %s19, 5
      %s109 = sadd.s32 %s12, %s108
      %s110 = sld [smem:[#allocation5 + %s109]]
      %s111 = smul.addr %s110, 16
      %s112 = scalar_lea.hbm %s1, %s111
      %s113 = scalar_lea.vmem [#allocation2], %s108
      %s114 = scalar_lea.sflag [#allocation3], 5
      // Predicated region
      $region29: #{tpu_custom_call.1} parent=5 // pred_check
        _
      $region30: #{tpu_custom_call.1} parent=5 // pred_check_branch
        %116 = sbr.rel target = $region32
      $region31: #{tpu_custom_call.1} parent=5 // pred_region
        %117 = sst [smem:[#allocation10]] [#allocation21]
        %118 = sst [smem:[#allocation11]] [#allocation20]
      $region32: #{tpu_custom_call.1} parent=5 // pred_fallthru
        _
      %120 = shalt.err (0)
      %s122 = sshll.u32 %s113, 4
      %s123 = int_to_ptr.vmem [resolvable:$true] %s122
      %125 = dma.hbm_to_vmem [thread:$0]  %s112, 16, %s123, %s114
      %s126 = sadd.s32 %s19, 6
      %s127 = sadd.s32 %s12, %s126
      %s128 = sld [smem:[#allocation5 + %s127]]
      %s129 = smul.addr %s128, 16
      %s130 = scalar_lea.hbm %s1, %s129
      %s131 = scalar_lea.vmem [#allocation2], %s126
      %s132 = scalar_lea.sflag [#allocation3], 6
      // Predicated region
      $region33: #{tpu_custom_call.1} parent=5 // pred_check
        _
      $region34: #{tpu_custom_call.1} parent=5 // pred_check_branch
        %134 = sbr.rel target = $region36
      $region35: #{tpu_custom_call.1} parent=5 // pred_region
        %135 = sst [smem:[#allocation10]] [#allocation23]
        %136 = sst [smem:[#allocation11]] [#allocation22]
      $region36: #{tpu_custom_call.1} parent=5 // pred_fallthru
        _
      %138 = shalt.err (0)
      %s140 = sshll.u32 %s131, 4
      %s141 = int_to_ptr.vmem [resolvable:$true] %s140
      %143 = dma.hbm_to_vmem [thread:$0]  %s130, 16, %s141, %s132
      %s144 = sadd.s32 %s19, 7
      %s145 = sadd.s32 %s12, %s144
      %s146 = sld [smem:[#allocation5 + %s145]]
      %s147 = smul.addr %s146, 16
      %s148 = scalar_lea.hbm %s1, %s147
      %s149 = scalar_lea.vmem [#allocation2], %s144
      %s150 = scalar_lea.sflag [#allocation3], 7
      // Predicated region
      $region37: #{tpu_custom_call.1} parent=5 // pred_check
        _
      $region38: #{tpu_custom_call.1} parent=5 // pred_check_branch
        %152 = sbr.rel target = $region40
      $region39: #{tpu_custom_call.1} parent=5 // pred_region
        %153 = sst [smem:[#allocation10]] [#allocation25]
        %154 = sst [smem:[#allocation11]] [#allocation24]
      $region40: #{tpu_custom_call.1} parent=5 // pred_fallthru
        _
      %156 = shalt.err (0)
      %s158 = sshll.u32 %s149, 4
      %s159 = int_to_ptr.vmem [resolvable:$true] %s158
      %161 = dma.hbm_to_vmem [thread:$0]  %s148, 16, %s159, %s150
    $region6: #{tpu_custom_call.1} parent=1 // loop_footer
      %s18 = sadd.s32 1, %s14
    $region7: #{tpu_custom_call.1} parent=1 // loop_footer_branch
      %13 = sbr.rel target = $region3
    $region8: #{tpu_custom_call.1} parent=1 // loop_exit
      _
    loop: start=0, step=1, limit=32
    $region41: #{tpu_custom_call.1} parent=1 // loop_pre_header
      _
    $region42: #{tpu_custom_call.1} parent=1 // loop_header
      %s163 = sphi 0, %s167
      %p164 = scmp.ge.s32.totalorder %s163, 32
    $region43: #{tpu_custom_call.1} parent=1 // loop_header_branch
      %166 = sbr.rel (%p164) target = $region47
    $region44: #{tpu_custom_call.1} parent=1 // loop_body
      %s168 = smul.u32 1, 1
      %s169 = sshll.u32 %s168, 4
      %170 = dma.done [#allocation3], %s169
      %s171 = scalar_lea.sflag [#allocation3], 1
      %s172 = sshll.u32 %s168, 4
      %173 = dma.done %s171, %s172
      %s174 = scalar_lea.sflag [#allocation3], 2
      %s175 = sshll.u32 %s168, 4
      %176 = dma.done %s174, %s175
      %s177 = scalar_lea.sflag [#allocation3], 3
      %s178 = sshll.u32 %s168, 4
      %179 = dma.done %s177, %s178
      %s180 = scalar_lea.sflag [#allocation3], 4
      %s181 = sshll.u32 %s168, 4
      %182 = dma.done %s180, %s181
      %s183 = scalar_lea.sflag [#allocation3], 5
      %s184 = sshll.u32 %s168, 4
      %185 = dma.done %s183, %s184
      %s186 = scalar_lea.sflag [#allocation3], 6
      %s187 = sshll.u32 %s168, 4
      %188 = dma.done %s186, %s187
      %s189 = scalar_lea.sflag [#allocation3], 7
      %s190 = sshll.u32 %s168, 4
      %191 = dma.done %s189, %s190
    $region45: #{tpu_custom_call.1} parent=1 // loop_footer
      %s167 = sadd.s32 1, %s163
    $region46: #{tpu_custom_call.1} parent=1 // loop_footer_branch
      %162 = sbr.rel target = $region42
    $region47: #{tpu_custom_call.1} parent=1 // loop_exit
      _
    %v192 = vld [vmem:[#allocation2] sm:$0xff]
    %v193 = vld [vmem:[#allocation2 + $0x8] sm:$0xff]
    %v194 = vld [vmem:[#allocation2 + $0x10] sm:$0xff]
    %v195 = vld [vmem:[#allocation2 + $0x18] sm:$0xff]
    %v196 = vld [vmem:[#allocation2 + $0x20] sm:$0xff]
    %v197 = vld [vmem:[#allocation2 + $0x28] sm:$0xff]
    %v198 = vld [vmem:[#allocation2 + $0x30] sm:$0xff]
    %v199 = vld [vmem:[#allocation2 + $0x38] sm:$0xff]
    %v200 = vld [vmem:[#allocation2 + $0x40] sm:$0xff]
    %v201 = vld [vmem:[#allocation2 + $0x48] sm:$0xff]
    %v202 = vld [vmem:[#allocation2 + $0x50] sm:$0xff]
    %v203 = vld [vmem:[#allocation2 + $0x58] sm:$0xff]
    %v204 = vld [vmem:[#allocation2 + $0x60] sm:$0xff]
    %v205 = vld [vmem:[#allocation2 + $0x68] sm:$0xff]
    %v206 = vld [vmem:[#allocation2 + $0x70] sm:$0xff]
    %v207 = vld [vmem:[#allocation2 + $0x78] sm:$0xff]
    %v208 = vld [vmem:[#allocation2 + $0x80] sm:$0xff]
    %v209 = vld [vmem:[#allocation2 + $0x88] sm:$0xff]
    %v210 = vld [vmem:[#allocation2 + $0x90] sm:$0xff]
    %v211 = vld [vmem:[#allocation2 + $0x98] sm:$0xff]
    %v212 = vld [vmem:[#allocation2 + $0xa0] sm:$0xff]
    %v213 = vld [vmem:[#allocation2 + $0xa8] sm:$0xff]
    %v214 = vld [vmem:[#allocation2 + $0xb0] sm:$0xff]
    %v215 = vld [vmem:[#allocation2 + $0xb8] sm:$0xff]
    %v216 = vld [vmem:[#allocation2 + $0xc0] sm:$0xff]
    %v217 = vld [vmem:[#allocation2 + $0xc8] sm:$0xff]
    %v218 = vld [vmem:[#allocation2 + $0xd0] sm:$0xff]
    %v219 = vld [vmem:[#allocation2 + $0xd8] sm:$0xff]
    %v220 = vld [vmem:[#allocation2 + $0xe0] sm:$0xff]
    %v221 = vld [vmem:[#allocation2 + $0xe8] sm:$0xff]
    %v222 = vld [vmem:[#allocation2 + $0xf0] sm:$0xff]
    %v223 = vld [vmem:[#allocation2 + $0xf8] sm:$0xff]
    %224 = vst [vmem:[#allocation6] sm:$0xff] %v192
    %225 = vst [vmem:[#allocation6 + $0x8] sm:$0xff] %v193
    %226 = vst [vmem:[#allocation6 + $0x10] sm:$0xff] %v194
    %227 = vst [vmem:[#allocation6 + $0x18] sm:$0xff] %v195
    %228 = vst [vmem:[#allocation6 + $0x20] sm:$0xff] %v196
    %229 = vst [vmem:[#allocation6 + $0x28] sm:$0xff] %v197
    %230 = vst [vmem:[#allocation6 + $0x30] sm:$0xff] %v198
    %231 = vst [vmem:[#allocation6 + $0x38] sm:$0xff] %v199
    %232 = vst [vmem:[#allocation6 + $0x40] sm:$0xff] %v200
    %233 = vst [vmem:[#allocation6 + $0x48] sm:$0xff] %v201
    %234 = vst [vmem:[#allocation6 + $0x50] sm:$0xff] %v202
    %235 = vst [vmem:[#allocation6 + $0x58] sm:$0xff] %v203
    %236 = vst [vmem:[#allocation6 + $0x60] sm:$0xff] %v204
    %237 = vst [vmem:[#allocation6 + $0x68] sm:$0xff] %v205
    %238 = vst [vmem:[#allocation6 + $0x70] sm:$0xff] %v206
    %239 = vst [vmem:[#allocation6 + $0x78] sm:$0xff] %v207
    %240 = vst [vmem:[#allocation6 + $0x80] sm:$0xff] %v208
    %241 = vst [vmem:[#allocation6 + $0x88] sm:$0xff] %v209
    %242 = vst [vmem:[#allocation6 + $0x90] sm:$0xff] %v210
    %243 = vst [vmem:[#allocation6 + $0x98] sm:$0xff] %v211
    %244 = vst [vmem:[#allocation6 + $0xa0] sm:$0xff] %v212
    %245 = vst [vmem:[#allocation6 + $0xa8] sm:$0xff] %v213
    %246 = vst [vmem:[#allocation6 + $0xb0] sm:$0xff] %v214
    %247 = vst [vmem:[#allocation6 + $0xb8] sm:$0xff] %v215
    %248 = vst [vmem:[#allocation6 + $0xc0] sm:$0xff] %v216
    %249 = vst [vmem:[#allocation6 + $0xc8] sm:$0xff] %v217
    %250 = vst [vmem:[#allocation6 + $0xd0] sm:$0xff] %v218
    %251 = vst [vmem:[#allocation6 + $0xd8] sm:$0xff] %v219
    %252 = vst [vmem:[#allocation6 + $0xe0] sm:$0xff] %v220
    %253 = vst [vmem:[#allocation6 + $0xe8] sm:$0xff] %v221
    %254 = vst [vmem:[#allocation6 + $0xf0] sm:$0xff] %v222
    %255 = vst [vmem:[#allocation6 + $0xf8] sm:$0xff] %v223
    // Predicated region
    $region48: #{tpu_custom_call.1} parent=1 // pred_check
      _
    $region49: #{tpu_custom_call.1} parent=1 // pred_check_branch
      %257 = sbr.rel (0) target = $region51
    $region50: #{tpu_custom_call.1} parent=1 // pred_region
      %s259 = ssub.s32 4096, 4096
      %260 = vsyncadd [#allocation7], %s259
      %s261 = sshll.u32 [#allocation6], 4
      %s262 = int_to_ptr.vmem [resolvable:$true] %s261
      %267 = dma.vmem_to_hbm [thread:$0]  %s262, 4096, %s2, [#allocation7], 128, 128, 8
    $region51: #{tpu_custom_call.1} parent=1 // pred_fallthru
      _
    // Predicated region
    $region52: #{tpu_custom_call.1} parent=1 // pred_check
      _
    $region53: #{tpu_custom_call.1} parent=1 // pred_check_branch
      %269 = sbr.rel (0) target = $region55
    $region54: #{tpu_custom_call.1} parent=1 // pred_region
      %270 = dma.done [#allocation7], 4096
    $region55: #{tpu_custom_call.1} parent=1 // pred_fallthru
      _
    %271 = vsyncpa [#allocation7], 1
  %272 = vsyncmov [#allocation3]
  %s273 = vpop.sfrf %272
  %p274 = scmp.eq.s32.totalorder %s273, 0
  %p275 = pneg %p274
  %277 = shalt.err (%p275)
  %s278 = scalar_lea.sflag [#allocation3], 1
  %279 = vsyncmov %s278
  %s280 = vpop.sfrf %279
  %p281 = scmp.eq.s32.totalorder %s280, 0
  %p282 = pneg %p281
  %284 = shalt.err (%p282)
  %s285 = scalar_lea.sflag [#allocation3], 2
  %286 = vsyncmov %s285
  %s287 = vpop.sfrf %286
  %p288 = scmp.eq.s32.totalorder %s287, 0
  %p289 = pneg %p288
  %291 = shalt.err (%p289)
  %s292 = scalar_lea.sflag [#allocation3], 3
  %293 = vsyncmov %s292
  %s294 = vpop.sfrf %293
  %p295 = scmp.eq.s32.totalorder %s294, 0
  %p296 = pneg %p295
  %298 = shalt.err (%p296)
  %s299 = scalar_lea.sflag [#allocation3], 4
  %300 = vsyncmov %s299
  %s301 = vpop.sfrf %300
  %p302 = scmp.eq.s32.totalorder %s301, 0
  %p303 = pneg %p302
  %305 = shalt.err (%p303)
  %s306 = scalar_lea.sflag [#allocation3], 5
  %307 = vsyncmov %s306
  %s308 = vpop.sfrf %307
  %p309 = scmp.eq.s32.totalorder %s308, 0
  %p310 = pneg %p309
  %312 = shalt.err (%p310)
  %s313 = scalar_lea.sflag [#allocation3], 6
  %314 = vsyncmov %s313
  %s315 = vpop.sfrf %314
  %p316 = scmp.eq.s32.totalorder %s315, 0
  %p317 = pneg %p316
  %319 = shalt.err (%p317)
  %s320 = scalar_lea.sflag [#allocation3], 7
  %321 = vsyncmov %s320
  %s322 = vpop.sfrf %321
  %p323 = scmp.eq.s32.totalorder %s322, 0
  %p324 = pneg %p323
  %326 = shalt.err (%p324)

</llo_original>
